<compile_context>
chip_gen: v6e
topology: v6e:2x2x1
jax: 0.10.0
libtpu: 0.0.40
codegen_flags: <defaults>
</compile_context>

<pallas_src>
import functools

import jax
import jax.numpy as jnp
from jax.experimental import pallas as pl
from jax.experimental.pallas import tpu as pltpu


# Safe on v5e/v6e (128 MiB physical) and v7x (64 MiB physical); overrides the
# small default scoped-VMEM limit (16 MiB on v5e), which is load-bearing there.
_VMEM_LIMIT_BYTES = 48 * 1024 * 1024
# q+k input bytes per grid step.  Live set ~4x (ins + outs, double buffered).
# TODO(synk): gate per chip generation via pltpu.get_tpu_info (v6e could take
#             12-16 MiB; v5e is happy at 4 MiB).
_TARGET_BLOCK_BYTES = 8 * 1024 * 1024


def _ceil_div(a: int, b: int) -> int:
    return -(-a // b)


# ---------------------------------------------------------------------------
# cos/sin table precompute (pure JAX glue, mirrors _pre_calculate_cos_sin)
# ---------------------------------------------------------------------------
def precompute_cos_sin(dim: int, seq_len: int, base: float = 10000.0,
                       dtype=jnp.float32):
    inv_freq = 1.0 / (base ** (jnp.arange(0, dim, 2, dtype=jnp.float32) / dim))
    t = jnp.arange(seq_len, dtype=jnp.float32)
    freqs = jnp.outer(t, inv_freq)                       # (S, dim//2)
    emb = jnp.concatenate([freqs, freqs], axis=-1)       # (S, dim)
    cos = jnp.cos(emb).reshape(seq_len, 1, 1, dim).astype(dtype)
    sin = jnp.sin(emb).reshape(seq_len, 1, 1, dim).astype(dtype)
    return cos, sin


def _pick_tile_s(S: int, row_bytes: int,
                 target_bytes: int = _TARGET_BLOCK_BYTES) -> int:
    """Seq-tile so q+k per step is ~target_bytes; cdiv grid, even step count."""
    steps = max(1, _ceil_div(S * row_bytes, target_bytes))
    # v7x has two TensorCores sharing the "parallel" seq axis: an even step
    # count keeps both busy.  (Single-TC chips are indifferent.)
    if steps > 1 and steps % 2 == 1:
        steps += 1
    tile_s = _ceil_div(S, steps)
    return max(1, min(S, tile_s))


# ---------------------------------------------------------------------------
# Shared in-kernel math.
#   out[..., :Dr]  = [x1*cos1 - x2*sin1, x2*cos2 + x1*sin2]   (rotate_half)
#   out[..., Dr:]  = x[..., Dr:]                               (pass-through)
# cos/sin broadcast over the head (or batch*head) axis.
# ---------------------------------------------------------------------------
def _apply_rope(x, cos, sin, d_rot, out_dtype):
    d_total = x.shape[-1]
    half = d_rot // 2
    xf = x.astype(jnp.float32)
    x1 = xf[..., :half]
    x2 = xf[..., half:d_rot]
    c1, c2 = cos[..., :half], cos[..., half:]
    s1, s2 = sin[..., :half], sin[..., half:]
    r1 = x1 * c1 - x2 * s1
    r2 = x2 * c2 + x1 * s2
    if d_rot == d_total:
        out = jnp.concatenate([r1, r2], axis=-1)
    else:
        out = jnp.concatenate([r1, r2, xf[..., d_rot:]], axis=-1)
    return out.astype(out_dtype)


# ---------------------------------------------------------------------------
# Kernel 1: no position ids — one shared cos/sin pair, lane-dense [S, B*H, D]
#           blocks, broadcast over the sublane (B*H) axis.
# ---------------------------------------------------------------------------
def _rope_shared_kernel(cos_ref, sin_ref, q_ref, k_ref, qo_ref, ko_ref, *,
                        d_rot):
    cos = cos_ref[...]          # (ts, 1, Dr) f32 — broadcasts over B*H
    sin = sin_ref[...]
    qo_ref[...] = _apply_rope(q_ref[...], cos, sin, d_rot, qo_ref.dtype)
    ko_ref[...] = _apply_rope(k_ref[...], cos, sin, d_rot, ko_ref.dtype)


def _rope_shared(query, key, cos_t, sin_t, d_rot, tile_s, donate):
    S, B, Hq, Dq = query.shape
    _, _, Hk, Dk = key.shape
    qf = query.reshape(S, B * Hq, Dq)      # contiguous, free view
    kf = key.reshape(S, B * Hk, Dk)

    row_bytes = (B * Hq * Dq * query.dtype.itemsize
                 + B * Hk * Dk * key.dtype.itemsize)
    if tile_s is None:
        tile_s = _pick_tile_s(S, row_bytes)
    tile_s = max(1, min(int(tile_s), S))
    grid = (_ceil_div(S, tile_s),)         # cdiv grid: ragged last block is OK

    cs_spec = pl.BlockSpec((tile_s, 1, d_rot), lambda i: (i, 0, 0))
    q_spec = pl.BlockSpec((tile_s, B * Hq, Dq), lambda i: (i, 0, 0))
    k_spec = pl.BlockSpec((tile_s, B * Hk, Dk), lambda i: (i, 0, 0))

    aliases = {2: 0, 3: 1} if donate else {}
    qo, ko = pl.pallas_call(
        functools.partial(_rope_shared_kernel, d_rot=d_rot),
        out_shape=(jax.ShapeDtypeStruct(qf.shape, query.dtype),
                   jax.ShapeDtypeStruct(kf.shape, key.dtype)),
        grid=grid,
        in_specs=[cs_spec, cs_spec, q_spec, k_spec],
        out_specs=(q_spec, k_spec),
        input_output_aliases=aliases,
        compiler_params=pltpu.CompilerParams(
            dimension_semantics=("parallel",),
            vmem_limit_bytes=_VMEM_LIMIT_BYTES),
    )(cos_t, sin_t, qf, kf)
    return qo.reshape(S, B, Hq, Dq), ko.reshape(S, B, Hk, Dk)


# ---------------------------------------------------------------------------
# Kernel 2: explicit position ids — compact tables gathered per (seq, batch)
#           row (NOT duplicated over heads), 2-D grid (seq-tile, batch),
#           broadcast over heads inside the kernel.  Two variants: shared
#           q/k tables (ids identical) or split tables.
# ---------------------------------------------------------------------------
def _rope_pos_kernel_shared_tab(cos_ref, sin_ref, q_ref, k_ref,
                                qo_ref, ko_ref, *, d_rot):
    cos = cos_ref[...][:, None, :]          # (ts, 1, Dr) — broadcast over H
    sin = sin_ref[...][:, None, :]
    qo_ref[...] = _apply_rope(q_ref[...], cos, sin, d_rot, qo_ref.dtype)
    ko_ref[...] = _apply_rope(k_ref[...], cos, sin, d_rot, ko_ref.dtype)


def _rope_pos_kernel_split_tab(cq_ref, sq_ref, ck_ref, sk_ref, q_ref, k_ref,
                               qo_ref, ko_ref, *, d_rot):
    qo_ref[...] = _apply_rope(q_ref[...], cq_ref[...][:, None, :],
                              sq_ref[...][:, None, :], d_rot, qo_ref.dtype)
    ko_ref[...] = _apply_rope(k_ref[...], ck_ref[...][:, None, :],
                              sk_ref[...][:, None, :], d_rot, ko_ref.dtype)


def _rope_pos(query, key, q_tabs, k_tabs, d_rot, tile_s, donate):
    S, B, Hq, Dq = query.shape
    _, _, Hk, Dk = key.shape
    row_bytes = Hq * Dq * query.dtype.itemsize + Hk * Dk * key.dtype.itemsize
    if tile_s is None:
        tile_s = _pick_tile_s(S, row_bytes)
    tile_s = max(1, min(int(tile_s), S))
    grid = (_ceil_div(S, tile_s), B)

    def tab_spec(tab):
        # tab: [S, CB, Dr] with CB in {1, B}; batch dim squeezed in-kernel.
        if tab.shape[1] == 1:
            return pl.BlockSpec((tile_s, None, d_rot), lambda i, b: (i, 0, 0))
        return pl.BlockSpec((tile_s, None, d_rot), lambda i, b: (i, b, 0))

    q_spec = pl.BlockSpec((tile_s, None, Hq, Dq), lambda i, b: (i, b, 0, 0))
    k_spec = pl.BlockSpec((tile_s, None, Hk, Dk), lambda i, b: (i, b, 0, 0))

    if k_tabs is None:          # q/k position ids identical: share the tables
        kernel = functools.partial(_rope_pos_kernel_shared_tab, d_rot=d_rot)
        tabs = list(q_tabs)
    else:
        kernel = functools.partial(_rope_pos_kernel_split_tab, d_rot=d_rot)
        tabs = list(q_tabs) + list(k_tabs)
    n_tab = len(tabs)
    in_specs = [tab_spec(t) for t in tabs] + [q_spec, k_spec]
    aliases = {n_tab: 0, n_tab + 1: 1} if donate else {}

    qo, ko = pl.pallas_call(
        kernel,
        out_shape=(jax.ShapeDtypeStruct(query.shape, query.dtype),
                   jax.ShapeDtypeStruct(key.shape, key.dtype)),
        grid=grid,
        in_specs=in_specs,
        out_specs=(q_spec, k_spec),
        input_output_aliases=aliases,
        compiler_params=pltpu.CompilerParams(
            dimension_semantics=("parallel", "parallel"),
            vmem_limit_bytes=_VMEM_LIMIT_BYTES),
    )(*tabs, query, key)
    return qo, ko


# ---------------------------------------------------------------------------
# Module-equivalent wrapper (RotaryEmbedding.forward)
# ---------------------------------------------------------------------------
def rotary_forward(query, key, cos, sin, rotary_dims,
                   query_position_ids=None, key_position_ids=None,
                   tile_s=None, donate=False):
    """query/key: [S, B, H, D_total]; cos/sin: [S_table, 1, 1, rotary_dims]."""
    S = query.shape[0]
    Dr = int(rotary_dims)
    assert Dr % 2 == 0, "rotary_dims must be even"
    assert query.shape[-1] >= Dr and key.shape[-1] >= Dr

    S_tab = cos.shape[0]
    cos2d = cos.reshape(S_tab, Dr).astype(jnp.float32)
    sin2d = sin.reshape(S_tab, Dr).astype(jnp.float32)

    if query_position_ids is None and key_position_ids is None:
        cos_t = cos2d[:S].reshape(S, 1, Dr)
        sin_t = sin2d[:S].reshape(S, 1, Dr)
        return _rope_shared(query, key, cos_t, sin_t, Dr, tile_s, donate)

    def table_for(pos):
        if pos is None:
            return (cos2d[:S][:, None, :], sin2d[:S][:, None, :])   # (S,1,Dr)
        pos = pos.astype(jnp.int32)
        return (cos2d[pos], sin2d[pos])                              # (S,B,Dr)

    q_tabs = table_for(query_position_ids)
    if key_position_ids is query_position_ids:
        k_tabs = None            # reuse gathered q tables inside the kernel
    else:
        k_tabs = table_for(key_position_ids)
    return _rope_pos(query, key, q_tabs, k_tabs, Dr, tile_s, donate)


# ---------------------------------------------------------------------------
# Pure-JAX reference (original rotate_half formulation)
# ---------------------------------------------------------------------------
def _rotate_half_ref(x):
    d = x.shape[-1]
    return jnp.concatenate([-x[..., d // 2:], x[..., :d // 2]], axis=-1)


def _rope_ref(query, key, cos, sin, rotary_dims, q_pos=None, k_pos=None):
    S, B, H, _ = query.shape
    Dr = rotary_dims
    cos2d = cos.reshape(-1, Dr)
    sin2d = sin.reshape(-1, Dr)

    def exp(t, pos):
        if pos is None:
            return jnp.broadcast_to(t[:S, None, None, :], (S, B, 1, Dr))
        return t[pos][:, :, None, :]

    def apply(x, c, s):
        xr = x[..., :Dr]
        rot = xr * c + _rotate_half_ref(xr) * s
        if Dr == x.shape[-1]:
            return rot
        return jnp.concatenate([rot, x[..., Dr:]], axis=-1)

    cq, sq = exp(cos2d, q_pos), exp(sin2d, q_pos)
    ck, sk = exp(cos2d, k_pos), exp(sin2d, k_pos)
    return apply(query, cq, sq), apply(key, ck, sk)


if __name__ == "__main__":
    # Small TPU-friendly shapes: seq=8, batch=2, heads=4, head_dim=128
    S, B, H, D = 8, 2, 4, 128
    key0 = jax.random.PRNGKey(0)
    kq, kk, kp1, kp2 = jax.random.split(key0, 4)

    query = jax.random.normal(kq, (S, B, H, D), dtype=jnp.float32)
    keyt = jax.random.normal(kk, (S, B, H, D), dtype=jnp.float32)
    cos, sin = precompute_cos_sin(dim=D, seq_len=S, base=10000.0)

    # --- 1) default path: no position ids (flattened lane-dense kernel) ---
    q_out, k_out = rotary_forward(query, keyt, cos, sin, rotary_dims=D)
    jax.block_until_ready((q_out, k_out))
    q_ref, k_ref = _rope_ref(query, keyt, cos, sin, D)
    assert jnp.allclose(q_out, q_ref, atol=1e-5, rtol=1e-5)
    assert jnp.allclose(k_out, k_ref, atol=1e-5, rtol=1e-5)

    # --- 2) ragged cdiv grid (tile_s does not divide S) ---
    q_out_r, k_out_r = rotary_forward(query, keyt, cos, sin, rotary_dims=D,
                                      tile_s=5)
    jax.block_until_ready((q_out_r, k_out_r))
    assert jnp.allclose(q_out_r, q_ref, atol=1e-5, rtol=1e-5)
    assert jnp.allclose(k_out_r, k_ref, atol=1e-5, rtol=1e-5)

    # --- 3) position ids, identical for q/k (shared gathered tables) ---
    pos = jax.random.randint(kp1, (S, B), 0, S)
    q_out2, k_out2 = rotary_forward(query, keyt, cos, sin, rotary_dims=D,
                                    query_position_ids=pos,
                                    key_position_ids=pos)
    jax.block_until_ready((q_out2, k_out2))
    q_ref2, k_ref2 = _rope_ref(query, keyt, cos, sin, D, q_pos=pos, k_pos=pos)
    assert jnp.allclose(q_out2, q_ref2, atol=1e-5, rtol=1e-5)
    assert jnp.allclose(k_out2, k_ref2, atol=1e-5, rtol=1e-5)

    # --- 4) position ids, different for q/k (split tables) ---
    pos_k = jax.random.randint(kp2, (S, B), 0, S)
    q_out3, k_out3 = rotary_forward(query, keyt, cos, sin, rotary_dims=D,
                                    query_position_ids=pos,
                                    key_position_ids=pos_k)
    jax.block_until_ready((q_out3, k_out3))
    q_ref3, k_ref3 = _rope_ref(query, keyt, cos, sin, D, q_pos=pos,
                               k_pos=pos_k)
    assert jnp.allclose(q_out3, q_ref3, atol=1e-5, rtol=1e-5)
    assert jnp.allclose(k_out3, k_ref3, atol=1e-5, rtol=1e-5)

    # --- 5) partial rotary (rotary_dims < head_dim), no position ids ---
    Dr = 64
    cos_p, sin_p = precompute_cos_sin(dim=Dr, seq_len=S, base=10000.0)
    q_out4, k_out4 = rotary_forward(query, keyt, cos_p, sin_p, rotary_dims=Dr)
    jax.block_until_ready((q_out4, k_out4))
    q_ref4, k_ref4 = _rope_ref(query, keyt, cos_p, sin_p, Dr)
    assert jnp.allclose(q_out4, q_ref4, atol=1e-5, rtol=1e-5)
    assert jnp.allclose(k_out4, k_ref4, atol=1e-5, rtol=1e-5)

    # --- 6) partial rotary + position ids ---
    q_out5, k_out5 = rotary_forward(query, keyt, cos_p, sin_p, rotary_dims=Dr,
                                    query_position_ids=pos,
                                    key_position_ids=pos)
    jax.block_until_ready((q_out5, k_out5))
    q_ref5, k_ref5 = _rope_ref(query, keyt, cos_p, sin_p, Dr, q_pos=pos,
                               k_pos=pos)
    assert jnp.allclose(q_out5, q_ref5, atol=1e-5, rtol=1e-5)
    assert jnp.allclose(k_out5, k_ref5, atol=1e-5, rtol=1e-5)

    print("KERNEL_OK")
</pallas_src>

<mosaic_0001>
module attributes {stable_mosaic.version = 11 : i64} {
  func.func @_rope_shared_kernel(%arg0: i32, %arg1: memref<8x1x128xf32, #tpu.memory_space<vmem>>, %arg2: memref<8x1x128xf32, #tpu.memory_space<vmem>>, %arg3: memref<8x8x128xf32, #tpu.memory_space<vmem>>, %arg4: memref<8x8x128xf32, #tpu.memory_space<vmem>>, %arg5: memref<8x8x128xf32, #tpu.memory_space<vmem>>, %arg6: memref<8x8x128xf32, #tpu.memory_space<vmem>>) attributes {dimension_semantics = [#tpu.dimension_semantics<parallel>], iteration_bounds = array<i64: 1>, scalar_prefetch = 0 : i64, scratch_operands = 0 : i64, tpu.core_type = #tpu.core_type<tc>, window_params = [{transform_indices = @transform_0, window_bounds = array<i64: 8, 1, 128>}, {transform_indices = @transform_1, window_bounds = array<i64: 8, 1, 128>}, {transform_indices = @transform_2, window_bounds = array<i64: 8, 8, 128>}, {transform_indices = @transform_3, window_bounds = array<i64: 8, 8, 128>}, {transform_indices = @transform_4, window_bounds = array<i64: 8, 8, 128>}, {transform_indices = @transform_5, window_bounds = array<i64: 8, 8, 128>}]} {
    %c0 = arith.constant 0 : index
    %c0_0 = arith.constant 0 : index
    %c0_1 = arith.constant 0 : index
    %0 = vector.load %arg1[%c0, %c0_0, %c0_1] : memref<8x1x128xf32, #tpu.memory_space<vmem>>, vector<8x1x128xf32>
    %c0_2 = arith.constant 0 : index
    %c0_3 = arith.constant 0 : index
    %c0_4 = arith.constant 0 : index
    %1 = vector.load %arg2[%c0_2, %c0_3, %c0_4] : memref<8x1x128xf32, #tpu.memory_space<vmem>>, vector<8x1x128xf32>
    %c0_5 = arith.constant 0 : index
    %c0_6 = arith.constant 0 : index
    %c0_7 = arith.constant 0 : index
    %2 = vector.load %arg3[%c0_5, %c0_6, %c0_7] : memref<8x8x128xf32, #tpu.memory_space<vmem>>, vector<8x8x128xf32>
    %3 = vector.extract_strided_slice %2 {offsets = [0, 0, 0], sizes = [8, 8, 64], strides = [1, 1, 1]} : vector<8x8x128xf32> to vector<8x8x64xf32>
    %4 = vector.extract_strided_slice %2 {offsets = [0, 0, 64], sizes = [8, 8, 64], strides = [1, 1, 1]} : vector<8x8x128xf32> to vector<8x8x64xf32>
    %5 = vector.extract_strided_slice %0 {offsets = [0, 0, 0], sizes = [8, 1, 64], strides = [1, 1, 1]} : vector<8x1x128xf32> to vector<8x1x64xf32>
    %6 = vector.extract_strided_slice %0 {offsets = [0, 0, 64], sizes = [8, 1, 64], strides = [1, 1, 1]} : vector<8x1x128xf32> to vector<8x1x64xf32>
    %7 = vector.extract_strided_slice %1 {offsets = [0, 0, 0], sizes = [8, 1, 64], strides = [1, 1, 1]} : vector<8x1x128xf32> to vector<8x1x64xf32>
    %8 = vector.extract_strided_slice %1 {offsets = [0, 0, 64], sizes = [8, 1, 64], strides = [1, 1, 1]} : vector<8x1x128xf32> to vector<8x1x64xf32>
    %9 = vector.broadcast %5 : vector<8x1x64xf32> to vector<8x8x64xf32>
    %10 = arith.mulf %3, %9 : vector<8x8x64xf32>
    %11 = vector.broadcast %7 : vector<8x1x64xf32> to vector<8x8x64xf32>
    %12 = arith.mulf %4, %11 : vector<8x8x64xf32>
    %13 = arith.subf %10, %12 : vector<8x8x64xf32>
    %14 = vector.broadcast %6 : vector<8x1x64xf32> to vector<8x8x64xf32>
    %15 = arith.mulf %4, %14 : vector<8x8x64xf32>
    %16 = vector.broadcast %8 : vector<8x1x64xf32> to vector<8x8x64xf32>
    %17 = arith.mulf %3, %16 : vector<8x8x64xf32>
    %18 = arith.addf %15, %17 : vector<8x8x64xf32>
    %19 = tpu.concatenate %13, %18 in 2 : vector<8x8x64xf32>, vector<8x8x64xf32> -> vector<8x8x128xf32>
    %c0_8 = arith.constant 0 : index
    %c0_9 = arith.constant 0 : index
    %c0_10 = arith.constant 0 : index
    %20 = vector.load %arg5[%c0_8, %c0_9, %c0_10] : memref<8x8x128xf32, #tpu.memory_space<vmem>>, vector<8x8x128xf32>
    tpu.vector_store %arg5[%c0_8, %c0_9, %c0_10], %19 {strides = array<i32>} : memref<8x8x128xf32, #tpu.memory_space<vmem>>, vector<8x8x128xf32>,
    %c0_11 = arith.constant 0 : index
    %c0_12 = arith.constant 0 : index
    %c0_13 = arith.constant 0 : index
    %21 = vector.load %arg4[%c0_11, %c0_12, %c0_13] : memref<8x8x128xf32, #tpu.memory_space<vmem>>, vector<8x8x128xf32>
    %22 = vector.extract_strided_slice %21 {offsets = [0, 0, 0], sizes = [8, 8, 64], strides = [1, 1, 1]} : vector<8x8x128xf32> to vector<8x8x64xf32>
    %23 = vector.extract_strided_slice %21 {offsets = [0, 0, 64], sizes = [8, 8, 64], strides = [1, 1, 1]} : vector<8x8x128xf32> to vector<8x8x64xf32>
    %24 = vector.extract_strided_slice %0 {offsets = [0, 0, 0], sizes = [8, 1, 64], strides = [1, 1, 1]} : vector<8x1x128xf32> to vector<8x1x64xf32>
    %25 = vector.extract_strided_slice %0 {offsets = [0, 0, 64], sizes = [8, 1, 64], strides = [1, 1, 1]} : vector<8x1x128xf32> to vector<8x1x64xf32>
    %26 = vector.extract_strided_slice %1 {offsets = [0, 0, 0], sizes = [8, 1, 64], strides = [1, 1, 1]} : vector<8x1x128xf32> to vector<8x1x64xf32>
    %27 = vector.extract_strided_slice %1 {offsets = [0, 0, 64], sizes = [8, 1, 64], strides = [1, 1, 1]} : vector<8x1x128xf32> to vector<8x1x64xf32>
    %28 = vector.broadcast %24 : vector<8x1x64xf32> to vector<8x8x64xf32>
    %29 = arith.mulf %22, %28 : vector<8x8x64xf32>
    %30 = vector.broadcast %26 : vector<8x1x64xf32> to vector<8x8x64xf32>
    %31 = arith.mulf %23, %30 : vector<8x8x64xf32>
    %32 = arith.subf %29, %31 : vector<8x8x64xf32>
    %33 = vector.broadcast %25 : vector<8x1x64xf32> to vector<8x8x64xf32>
    %34 = arith.mulf %23, %33 : vector<8x8x64xf32>
    %35 = vector.broadcast %27 : vector<8x1x64xf32> to vector<8x8x64xf32>
    %36 = arith.mulf %22, %35 : vector<8x8x64xf32>
    %37 = arith.addf %34, %36 : vector<8x8x64xf32>
    %38 = tpu.concatenate %32, %37 in 2 : vector<8x8x64xf32>, vector<8x8x64xf32> -> vector<8x8x128xf32>
    %c0_14 = arith.constant 0 : index
    %c0_15 = arith.constant 0 : index
    %c0_16 = arith.constant 0 : index
    %39 = vector.load %arg6[%c0_14, %c0_15, %c0_16] : memref<8x8x128xf32, #tpu.memory_space<vmem>>, vector<8x8x128xf32>
    tpu.vector_store %arg6[%c0_14, %c0_15, %c0_16], %38 {strides = array<i32>} : memref<8x8x128xf32, #tpu.memory_space<vmem>>, vector<8x8x128xf32>,
    return
  }
  func.func @transform_0(%arg0: i32) -> (i32, i32, i32) {
    %c0_i32 = arith.constant 0 : i32
    %c0_i32_0 = arith.constant 0 : i32
    %c0_i32_1 = arith.constant 0 : i32
    return %arg0, %c0_i32, %c0_i32_0 : i32, i32, i32
  }
  func.func @transform_1(%arg0: i32) -> (i32, i32, i32) {
    %c0_i32 = arith.constant 0 : i32
    %c0_i32_0 = arith.constant 0 : i32
    %c0_i32_1 = arith.constant 0 : i32
    return %arg0, %c0_i32, %c0_i32_0 : i32, i32, i32
  }
  func.func @transform_2(%arg0: i32) -> (i32, i32, i32) {
    %c0_i32 = arith.constant 0 : i32
    %c0_i32_0 = arith.constant 0 : i32
    %c0_i32_1 = arith.constant 0 : i32
    return %arg0, %c0_i32, %c0_i32_0 : i32, i32, i32
  }
  func.func @transform_3(%arg0: i32) -> (i32, i32, i32) {
    %c0_i32 = arith.constant 0 : i32
    %c0_i32_0 = arith.constant 0 : i32
    %c0_i32_1 = arith.constant 0 : i32
    return %arg0, %c0_i32, %c0_i32_0 : i32, i32, i32
  }
  func.func @transform_4(%arg0: i32) -> (i32, i32, i32) {
    %c0_i32 = arith.constant 0 : i32
    %c0_i32_0 = arith.constant 0 : i32
    %c0_i32_1 = arith.constant 0 : i32
    return %arg0, %c0_i32, %c0_i32_0 : i32, i32, i32
  }
  func.func @transform_5(%arg0: i32) -> (i32, i32, i32) {
    %c0_i32 = arith.constant 0 : i32
    %c0_i32_0 = arith.constant 0 : i32
    %c0_i32_1 = arith.constant 0 : i32
    return %arg0, %c0_i32, %c0_i32_0 : i32, i32, i32
  }
}

</mosaic_0001>

<llo_original>
// kernel: tpu_custom_call.1
$region0: #{tpu_custom_call.1}
  #allocation0 [shape = 'u32[]', space=smem, size = 0x4, offset = 0x4, fixed_abs, tag = 'smem constant byte address 0x4 - core index']
  #allocation1 [shape = 'u32[144,128]{1,0:T(1,128)}', space=vmem, size = 0x12000, scoped, tag = 'internal scratch']
  %s0 = inlined_call_operand.hbm [shape: f32[8,1,128], index: 0, kind: input, shape index: {}]
  %s1 = inlined_call_operand.hbm [shape: f32[8,1,128], index: 1, kind: input, shape index: {}]
  %s2 = inlined_call_operand.hbm [shape: f32[8,8,128], index: 2, kind: input, shape index: {}]
  %s3 = inlined_call_operand.hbm [shape: f32[8,8,128], index: 3, kind: input, shape index: {}]
  %s4 = inlined_call_operand.hbm [shape: f32[8,8,128], index: 4, kind: output, shape index: {0}]
  %s5 = inlined_call_operand.hbm [shape: f32[8,8,128], index: 5, kind: output, shape index: {1}]
  %6 = xla_tuple %s4, %s5
  %s7 = sld [smem:[#allocation0]]
  $region50: #{tpu_custom_call.1} parent=0
    _
  %s9 = ssub.s32 1, %s7
  %s10 = scalar_select 0, %s9, %s7
  $region1: #{tpu_custom_call.1} parent=0
    #allocation2 [shape = 'u8[4096]{0}', space=vmem, size = 0x1000, scoped, tag = 'input window, operand 0, single buffered']
    #allocation3 [shape = 's32[1]{0}', space=sflag, size = 0x4, scoped, tag = 'scoped memory for tpu_custom_call.1']
    #allocation4 [shape = 's32[1]{0}', space=sflag, size = 0x4, scoped, tag = 'scoped memory for tpu_custom_call.1']
    #allocation5 [shape = 'u8[4096]{0}', space=vmem, size = 0x1000, scoped, tag = 'input window, operand 1, single buffered']
    #allocation6 [shape = 's32[1]{0}', space=sflag, size = 0x4, scoped, tag = 'scoped memory for tpu_custom_call.1']
    #allocation7 [shape = 'u8[32768]{0}', space=vmem, size = 0x8000, scoped, tag = 'input window, operand 2, single buffered']
    #allocation8 [shape = 'u8[32768]{0}', space=vmem, size = 0x8000, scoped, tag = 'input window, operand 3, single buffered']
    #allocation9 [shape = 's32[1]{0}', space=sflag, size = 0x4, scoped, tag = 'scoped memory for tpu_custom_call.1']
    #allocation10 [shape = 'u8[32768]{0}', space=vmem, size = 0x8000, scoped, tag = 'output window, operand 0, single buffered']
    #allocation11 [shape = 'u8[32768]{0}', space=vmem, size = 0x8000, scoped, tag = 'output window, operand 1, single buffered']
    #allocation12 [shape = 's32[1]{0}', space=sflag, size = 0x4, scoped, tag = 'scoped memory for tpu_custom_call.1']
    %11 = vsyncpa [#allocation3], 0
    %12 = vsyncpa [#allocation6], 0
    %13 = vsyncpa [#allocation9], 0
    %14 = vsyncpa [#allocation4], 0
    %15 = vsyncpa [#allocation12], 0
    // Predicated region
    $region2: #{tpu_custom_call.1} parent=1 // pred_check
      _
    $region3: #{tpu_custom_call.1} parent=1 // pred_check_branch
      %17 = sbr.rel (0) target = $region5
    $region4: #{tpu_custom_call.1} parent=1 // pred_region
      %s19 = ssub.s32 128, 128
      %20 = vsyncadd [#allocation3], %s19
      %s21 = sshll.u32 [#allocation2], 4
      %s22 = int_to_ptr.vmem [resolvable:$true] %s21
      %27 = dma.hbm_to_vmem [thread:$0]  %s0, 128, %s22, [#allocation3], 16, 16, 1
    $region5: #{tpu_custom_call.1} parent=1 // pred_fallthru
      _
    // Predicated region
    $region6: #{tpu_custom_call.1} parent=1 // pred_check
      _
    $region7: #{tpu_custom_call.1} parent=1 // pred_check_branch
      %29 = sbr.rel (0) target = $region9
    $region8: #{tpu_custom_call.1} parent=1 // pred_region
      %s31 = ssub.s32 128, 128
      %32 = vsyncadd [#allocation6], %s31
      %s33 = sshll.u32 [#allocation5], 4
      %s34 = int_to_ptr.vmem [resolvable:$true] %s33
      %39 = dma.hbm_to_vmem [thread:$0]  %s1, 128, %s34, [#allocation6], 16, 16, 1
    $region9: #{tpu_custom_call.1} parent=1 // pred_fallthru
      _
    // Predicated region
    $region10: #{tpu_custom_call.1} parent=1 // pred_check
      _
    $region11: #{tpu_custom_call.1} parent=1 // pred_check_branch
      %41 = sbr.rel (0) target = $region13
    $region12: #{tpu_custom_call.1} parent=1 // pred_region
      %s43 = ssub.s32 1024, 1024
      %44 = vsyncadd [#allocation6], %s43
      %s45 = sshll.u32 [#allocation7], 4
      %s46 = int_to_ptr.vmem [resolvable:$true] %s45
      %51 = dma.hbm_to_vmem [thread:$0]  %s2, 1024, %s46, [#allocation6], 128, 128, 8
    $region13: #{tpu_custom_call.1} parent=1 // pred_fallthru
      _
    // Predicated region
    $region14: #{tpu_custom_call.1} parent=1 // pred_check
      _
    $region15: #{tpu_custom_call.1} parent=1 // pred_check_branch
      %53 = sbr.rel (0) target = $region17
    $region16: #{tpu_custom_call.1} parent=1 // pred_region
      %s55 = ssub.s32 1024, 1024
      %56 = vsyncadd [#allocation9], %s55
      %s57 = sshll.u32 [#allocation8], 4
      %s58 = int_to_ptr.vmem [resolvable:$true] %s57
      %63 = dma.hbm_to_vmem [thread:$0]  %s3, 1024, %s58, [#allocation9], 128, 128, 8
    $region17: #{tpu_custom_call.1} parent=1 // pred_fallthru
      _
    // Predicated region
    $region18: #{tpu_custom_call.1} parent=1 // pred_check
      _
    $region19: #{tpu_custom_call.1} parent=1 // pred_check_branch
      %65 = sbr.rel (0) target = $region21
    $region20: #{tpu_custom_call.1} parent=1 // pred_region
      %66 = dma.done [#allocation3], 128
    $region21: #{tpu_custom_call.1} parent=1 // pred_fallthru
      _
    // Predicated region
    $region22: #{tpu_custom_call.1} parent=1 // pred_check
      _
    $region23: #{tpu_custom_call.1} parent=1 // pred_check_branch
      %68 = sbr.rel (0) target = $region25
    $region24: #{tpu_custom_call.1} parent=1 // pred_region
      %69 = dma.done [#allocation6], 128
    $region25: #{tpu_custom_call.1} parent=1 // pred_fallthru
      _
    // Predicated region
    $region26: #{tpu_custom_call.1} parent=1 // pred_check
      _
    $region27: #{tpu_custom_call.1} parent=1 // pred_check_branch
      %71 = sbr.rel (0) target = $region29
    $region28: #{tpu_custom_call.1} parent=1 // pred_region
      %72 = dma.done [#allocation6], 1024
    $region29: #{tpu_custom_call.1} parent=1 // pred_fallthru
      _
    // Predicated region
    $region30: #{tpu_custom_call.1} parent=1 // pred_check
      _
    $region31: #{tpu_custom_call.1} parent=1 // pred_check_branch
      %74 = sbr.rel (0) target = $region33
    $region32: #{tpu_custom_call.1} parent=1 // pred_region
      %75 = dma.done [#allocation9], 1024
    $region33: #{tpu_custom_call.1} parent=1 // pred_fallthru
      _
    %v76 = vld [vmem:[#allocation2] sm:$0x1]
    %v77 = vld [vmem:[#allocation2 + $0x1] sm:$0x1]
    %v78 = vld [vmem:[#allocation2 + $0x2] sm:$0x1]
    %v79 = vld [vmem:[#allocation2 + $0x3] sm:$0x1]
    %v80 = vld [vmem:[#allocation2 + $0x4] sm:$0x1]
    %v81 = vld [vmem:[#allocation2 + $0x5] sm:$0x1]
    %v82 = vld [vmem:[#allocation2 + $0x6] sm:$0x1]
    %v83 = vld [vmem:[#allocation2 + $0x7] sm:$0x1]
    %v84 = vld [vmem:[#allocation5] sm:$0x1]
    %v85 = vld [vmem:[#allocation5 + $0x1] sm:$0x1]
    %v86 = vld [vmem:[#allocation5 + $0x2] sm:$0x1]
    %v87 = vld [vmem:[#allocation5 + $0x3] sm:$0x1]
    %v88 = vld [vmem:[#allocation5 + $0x4] sm:$0x1]
    %v89 = vld [vmem:[#allocation5 + $0x5] sm:$0x1]
    %v90 = vld [vmem:[#allocation5 + $0x6] sm:$0x1]
    %v91 = vld [vmem:[#allocation5 + $0x7] sm:$0x1]
    %v92 = vld [vmem:[#allocation7] sm:$0xff]
    %v93 = vld [vmem:[#allocation7 + $0x8] sm:$0xff]
    %v94 = vld [vmem:[#allocation7 + $0x10] sm:$0xff]
    %v95 = vld [vmem:[#allocation7 + $0x18] sm:$0xff]
    %v96 = vld [vmem:[#allocation7 + $0x20] sm:$0xff]
    %v97 = vld [vmem:[#allocation7 + $0x28] sm:$0xff]
    %v98 = vld [vmem:[#allocation7 + $0x30] sm:$0xff]
    %v99 = vld [vmem:[#allocation7 + $0x38] sm:$0xff]
    %v108 = vlaneseq
    %v109 = vshrl.u32 %v108, 7
    %v110 = vsub.s32 0, %v109
    %v111 = vrot.slane %v76, %v110
    %v112 = vlaneseq
    %v113 = vshrl.u32 %v112, 7
    %v114 = vsub.s32 0, %v113
    %v115 = vrot.slane %v77, %v114
    %v116 = vlaneseq
    %v117 = vshrl.u32 %v116, 7
    %v118 = vsub.s32 0, %v117
    %v119 = vrot.slane %v78, %v118
    %v120 = vlaneseq
    %v121 = vshrl.u32 %v120, 7
    %v122 = vsub.s32 0, %v121
    %v123 = vrot.slane %v79, %v122
    %v124 = vlaneseq
    %v125 = vshrl.u32 %v124, 7
    %v126 = vsub.s32 0, %v125
    %v127 = vrot.slane %v80, %v126
    %v128 = vlaneseq
    %v129 = vshrl.u32 %v128, 7
    %v130 = vsub.s32 0, %v129
    %v131 = vrot.slane %v81, %v130
    %v132 = vlaneseq
    %v133 = vshrl.u32 %v132, 7
    %v134 = vsub.s32 0, %v133
    %v135 = vrot.slane %v82, %v134
    %v136 = vlaneseq
    %v137 = vshrl.u32 %v136, 7
    %v138 = vsub.s32 0, %v137
    %v139 = vrot.slane %v83, %v138
    %v148 = vmul.f32 %v92, %v111
    %v149 = vmul.f32 %v93, %v115
    %v150 = vmul.f32 %v94, %v119
    %v151 = vmul.f32 %v95, %v123
    %v152 = vmul.f32 %v96, %v127
    %v153 = vmul.f32 %v97, %v131
    %v154 = vmul.f32 %v98, %v135
    %v155 = vmul.f32 %v99, %v139
    %v164 = vlaneseq
    %v165 = vshrl.u32 %v164, 7
    %v166 = vsub.s32 0, %v165
    %v167 = vrot.slane %v84, %v166
    %v168 = vlaneseq
    %v169 = vshrl.u32 %v168, 7
    %v170 = vsub.s32 0, %v169
    %v171 = vrot.slane %v85, %v170
    %v172 = vlaneseq
    %v173 = vshrl.u32 %v172, 7
    %v174 = vsub.s32 0, %v173
    %v175 = vrot.slane %v86, %v174
    %v176 = vlaneseq
    %v177 = vshrl.u32 %v176, 7
    %v178 = vsub.s32 0, %v177
    %v179 = vrot.slane %v87, %v178
    %v180 = vlaneseq
    %v181 = vshrl.u32 %v180, 7
    %v182 = vsub.s32 0, %v181
    %v183 = vrot.slane %v88, %v182
    %v184 = vlaneseq
    %v185 = vshrl.u32 %v184, 7
    %v186 = vsub.s32 0, %v185
    %v187 = vrot.slane %v89, %v186
    %v188 = vlaneseq
    %v189 = vshrl.u32 %v188, 7
    %v190 = vsub.s32 0, %v189
    %v191 = vrot.slane %v90, %v190
    %v192 = vlaneseq
    %v193 = vshrl.u32 %v192, 7
    %v194 = vsub.s32 0, %v193
    %v195 = vrot.slane %v91, %v194
    %196 = vrot.lane.b32.xlu0 %v167, 64
    %v197 = vpop.permute.xlu0 %196
    %198 = vrot.lane.b32.xlu0 %v171, 64
    %v199 = vpop.permute.xlu0 %198
    %200 = vrot.lane.b32.xlu0 %v175, 64
    %v201 = vpop.permute.xlu0 %200
    %202 = vrot.lane.b32.xlu0 %v179, 64
    %v203 = vpop.permute.xlu0 %202
    %204 = vrot.lane.b32.xlu0 %v183, 64
    %v205 = vpop.permute.xlu0 %204
    %206 = vrot.lane.b32.xlu0 %v187, 64
    %v207 = vpop.permute.xlu0 %206
    %208 = vrot.lane.b32.xlu0 %v191, 64
    %v209 = vpop.permute.xlu0 %208
    %210 = vrot.lane.b32.xlu0 %v195, 64
    %v211 = vpop.permute.xlu0 %210
    %v220 = vmul.f32 %v92, %v197
    %v221 = vmul.f32 %v93, %v199
    %v222 = vmul.f32 %v94, %v201
    %v223 = vmul.f32 %v95, %v203
    %v224 = vmul.f32 %v96, %v205
    %v225 = vmul.f32 %v97, %v207
    %v226 = vmul.f32 %v98, %v209
    %v227 = vmul.f32 %v99, %v211
    %236 = vrot.lane.b32.xlu0 %v220, 64
    %v237 = vpop.permute.xlu0 %236
    %238 = vrot.lane.b32.xlu0 %v221, 64
    %v239 = vpop.permute.xlu0 %238
    %240 = vrot.lane.b32.xlu0 %v222, 64
    %v241 = vpop.permute.xlu0 %240
    %242 = vrot.lane.b32.xlu0 %v223, 64
    %v243 = vpop.permute.xlu0 %242
    %244 = vrot.lane.b32.xlu0 %v224, 64
    %v245 = vpop.permute.xlu0 %244
    %246 = vrot.lane.b32.xlu0 %v225, 64
    %v247 = vpop.permute.xlu0 %246
    %248 = vrot.lane.b32.xlu0 %v226, 64
    %v249 = vpop.permute.xlu0 %248
    %250 = vrot.lane.b32.xlu0 %v227, 64
    %v251 = vpop.permute.xlu0 %250
    %v260 = vsub.f32 %v148, %v237
    %v261 = vsub.f32 %v149, %v239
    %v262 = vsub.f32 %v150, %v241
    %v263 = vsub.f32 %v151, %v243
    %v264 = vsub.f32 %v152, %v245
    %v265 = vsub.f32 %v153, %v247
    %v266 = vsub.f32 %v154, %v249
    %v267 = vsub.f32 %v155, %v251
    %v268 = vadd.f32 %v148, %v237
    %v269 = vadd.f32 %v149, %v239
    %v270 = vadd.f32 %v150, %v241
    %v271 = vadd.f32 %v151, %v243
    %v272 = vadd.f32 %v152, %v245
    %v273 = vadd.f32 %v153, %v247
    %v274 = vadd.f32 %v154, %v249
    %v275 = vadd.f32 %v155, %v251
    %vm276 = vcmask 523264
    %v277 = vsel %vm276, %v260, %v268
    %v278 = vsel %vm276, %v261, %v269
    %v279 = vsel %vm276, %v262, %v270
    %v280 = vsel %vm276, %v263, %v271
    %v281 = vsel %vm276, %v264, %v272
    %v282 = vsel %vm276, %v265, %v273
    %v283 = vsel %vm276, %v266, %v274
    %v284 = vsel %vm276, %v267, %v275
    %285 = vst [vmem:[#allocation10] sm:$0xff] %v277
    %286 = vst [vmem:[#allocation10 + $0x8] sm:$0xff] %v278
    %287 = vst [vmem:[#allocation10 + $0x10] sm:$0xff] %v279
    %288 = vst [vmem:[#allocation10 + $0x18] sm:$0xff] %v280
    %289 = vst [vmem:[#allocation10 + $0x20] sm:$0xff] %v281
    %290 = vst [vmem:[#allocation10 + $0x28] sm:$0xff] %v282
    %291 = vst [vmem:[#allocation10 + $0x30] sm:$0xff] %v283
    %292 = vst [vmem:[#allocation10 + $0x38] sm:$0xff] %v284
    %v293 = vld [vmem:[#allocation8] sm:$0xff]
    %v294 = vld [vmem:[#allocation8 + $0x8] sm:$0xff]
    %v295 = vld [vmem:[#allocation8 + $0x10] sm:$0xff]
    %v296 = vld [vmem:[#allocation8 + $0x18] sm:$0xff]
    %v297 = vld [vmem:[#allocation8 + $0x20] sm:$0xff]
    %v298 = vld [vmem:[#allocation8 + $0x28] sm:$0xff]
    %v299 = vld [vmem:[#allocation8 + $0x30] sm:$0xff]
    %v300 = vld [vmem:[#allocation8 + $0x38] sm:$0xff]
    %v301 = vmul.f32 %v293, %v111
    %v302 = vmul.f32 %v294, %v115
    %v303 = vmul.f32 %v295, %v119
    %v304 = vmul.f32 %v296, %v123
    %v305 = vmul.f32 %v297, %v127
    %v306 = vmul.f32 %v298, %v131
    %v307 = vmul.f32 %v299, %v135
    %v308 = vmul.f32 %v300, %v139
    %v309 = vmul.f32 %v293, %v197
    %v310 = vmul.f32 %v294, %v199
    %v311 = vmul.f32 %v295, %v201
    %v312 = vmul.f32 %v296, %v203
    %v313 = vmul.f32 %v297, %v205
    %v314 = vmul.f32 %v298, %v207
    %v315 = vmul.f32 %v299, %v209
    %v316 = vmul.f32 %v300, %v211
    %325 = vrot.lane.b32.xlu0 %v309, 64
    %v326 = vpop.permute.xlu0 %325
    %327 = vrot.lane.b32.xlu0 %v310, 64
    %v328 = vpop.permute.xlu0 %327
    %329 = vrot.lane.b32.xlu0 %v311, 64
    %v330 = vpop.permute.xlu0 %329
    %331 = vrot.lane.b32.xlu0 %v312, 64
    %v332 = vpop.permute.xlu0 %331
    %333 = vrot.lane.b32.xlu0 %v313, 64
    %v334 = vpop.permute.xlu0 %333
    %335 = vrot.lane.b32.xlu0 %v314, 64
    %v336 = vpop.permute.xlu0 %335
    %337 = vrot.lane.b32.xlu0 %v315, 64
    %v338 = vpop.permute.xlu0 %337
    %339 = vrot.lane.b32.xlu0 %v316, 64
    %v340 = vpop.permute.xlu0 %339
    %v349 = vsub.f32 %v301, %v326
    %v350 = vsub.f32 %v302, %v328
    %v351 = vsub.f32 %v303, %v330
    %v352 = vsub.f32 %v304, %v332
    %v353 = vsub.f32 %v305, %v334
    %v354 = vsub.f32 %v306, %v336
    %v355 = vsub.f32 %v307, %v338
    %v356 = vsub.f32 %v308, %v340
    %v357 = vadd.f32 %v301, %v326
    %v358 = vadd.f32 %v302, %v328
    %v359 = vadd.f32 %v303, %v330
    %v360 = vadd.f32 %v304, %v332
    %v361 = vadd.f32 %v305, %v334
    %v362 = vadd.f32 %v306, %v336
    %v363 = vadd.f32 %v307, %v338
    %v364 = vadd.f32 %v308, %v340
    %v365 = vsel %vm276, %v349, %v357
    %v366 = vsel %vm276, %v350, %v358
    %v367 = vsel %vm276, %v351, %v359
    %v368 = vsel %vm276, %v352, %v360
    %v369 = vsel %vm276, %v353, %v361
    %v370 = vsel %vm276, %v354, %v362
    %v371 = vsel %vm276, %v355, %v363
    %v372 = vsel %vm276, %v356, %v364
    %373 = vst [vmem:[#allocation11] sm:$0xff] %v365
    %374 = vst [vmem:[#allocation11 + $0x8] sm:$0xff] %v366
    %375 = vst [vmem:[#allocation11 + $0x10] sm:$0xff] %v367
    %376 = vst [vmem:[#allocation11 + $0x18] sm:$0xff] %v368
    %377 = vst [vmem:[#allocation11 + $0x20] sm:$0xff] %v369
    %378 = vst [vmem:[#allocation11 + $0x28] sm:$0xff] %v370
    %379 = vst [vmem:[#allocation11 + $0x30] sm:$0xff] %v371
    %380 = vst [vmem:[#allocation11 + $0x38] sm:$0xff] %v372
    // Predicated region
    $region34: #{tpu_custom_call.1} parent=1 // pred_check
      _
    $region35: #{tpu_custom_call.1} parent=1 // pred_check_branch
      %382 = sbr.rel (0) target = $region37
    $region36: #{tpu_custom_call.1} parent=1 // pred_region
      %s384 = ssub.s32 1024, 1024
      %385 = vsyncadd [#allocation4], %s384
      %s386 = sshll.u32 [#allocation10], 4
      %s387 = int_to_ptr.vmem [resolvable:$true] %s386
      %392 = dma.vmem_to_hbm [thread:$0]  %s387, 1024, %s4, [#allocation4], 128, 128, 8
    $region37: #{tpu_custom_call.1} parent=1 // pred_fallthru
      _
    // Predicated region
    $region38: #{tpu_custom_call.1} parent=1 // pred_check
      _
    $region39: #{tpu_custom_call.1} parent=1 // pred_check_branch
      %394 = sbr.rel (0) target = $region41
    $region40: #{tpu_custom_call.1} parent=1 // pred_region
      %s396 = ssub.s32 1024, 1024
      %397 = vsyncadd [#allocation12], %s396
      %s398 = sshll.u32 [#allocation11], 4
      %s399 = int_to_ptr.vmem [resolvable:$true] %s398
      %404 = dma.vmem_to_hbm [thread:$0]  %s399, 1024, %s5, [#allocation12], 128, 128, 8
    $region41: #{tpu_custom_call.1} parent=1 // pred_fallthru
      _
    // Predicated region
    $region42: #{tpu_custom_call.1} parent=1 // pred_check
      _
    $region43: #{tpu_custom_call.1} parent=1 // pred_check_branch
      %406 = sbr.rel (0) target = $region45
    $region44: #{tpu_custom_call.1} parent=1 // pred_region
      %407 = dma.done [#allocation4], 1024
    $region45: #{tpu_custom_call.1} parent=1 // pred_fallthru
      _
    // Predicated region
    $region46: #{tpu_custom_call.1} parent=1 // pred_check
      _
    $region47: #{tpu_custom_call.1} parent=1 // pred_check_branch
      %409 = sbr.rel (0) target = $region49
    $region48: #{tpu_custom_call.1} parent=1 // pred_region
      %410 = dma.done [#allocation12], 1024
    $region49: #{tpu_custom_call.1} parent=1 // pred_fallthru
      _
    %411 = vsyncpa [#allocation3], 1
    %412 = vsyncpa [#allocation6], 1
    %413 = vsyncpa [#allocation9], 1
    %414 = vsyncpa [#allocation4], 1
    %415 = vsyncpa [#allocation12], 1

</llo_original>
